<compile_context>
chip_gen: v7x
topology: tpu7x:2x2x1
jax: 0.10.0
libtpu: 0.0.40
codegen_flags: <defaults>
</compile_context>

<pallas_src>
import functools
import math

import jax
import jax.numpy as jnp
from jax import lax
from jax.experimental import pallas as pl
from jax.experimental.pallas import tpu as pltpu

_LANE = 128


# ----------------------------- kernels -------------------------------------


def _ode_func_kernel(x_ref, w1_ref, b1_ref, w2_ref, b2_ref, w3_ref, b3_ref,
                     out_ref):
    """ODEFunc.forward in transposed layout: out = W3 @ tanh(W2 @ tanh(W1 @ x + b1) + b2) + b3.

    x_ref/out_ref: (H, tb)   -- batch on lanes (lane-dense stores)
    w*_ref:        (H, H)    -- PyTorch (out, in) layout, VMEM-resident across the grid
    b*_ref:        (H, 1)    -- broadcast along lanes
    """
    x = x_ref[...].astype(jnp.float32)
    z = jnp.tanh(jnp.dot(w1_ref[...], x, preferred_element_type=jnp.float32)
                 + b1_ref[...])
    z = jnp.tanh(jnp.dot(w2_ref[...], z, preferred_element_type=jnp.float32)
                 + b2_ref[...])
    y = jnp.dot(w3_ref[...], z, preferred_element_type=jnp.float32) + b3_ref[...]
    out_ref[...] = y.astype(out_ref.dtype)


def _ode_integrate_kernel(h0_ref, w1_ref, b1_ref, w2_ref, b2_ref, w3_ref, b3_ref,
                          out_ref, *, dt, n_steps, solver):
    """All fixed solver steps as an in-kernel unrolled loop; h carried as a value."""
    H, tb = out_ref.shape

    # Hoist the bias broadcasts ONCE (JAX does not CSE broadcast_in_dim; RK4
    # would otherwise emit 12 broadcasts per step).
    b1 = pl.broadcast_to(b1_ref[...].astype(jnp.float32), (H, tb))
    b2 = pl.broadcast_to(b2_ref[...].astype(jnp.float32), (H, tb))
    b3 = pl.broadcast_to(b3_ref[...].astype(jnp.float32), (H, tb))

    def f(x):
        # Weight refs are read at the dot call sites (no whole-tile locals).
        z = jnp.tanh(jnp.dot(w1_ref[...], x, preferred_element_type=jnp.float32) + b1)
        z = jnp.tanh(jnp.dot(w2_ref[...], z, preferred_element_type=jnp.float32) + b2)
        return jnp.dot(w3_ref[...], z, preferred_element_type=jnp.float32) + b3

    def step(_, h):
        if solver == "euler":
            return h + dt * f(h)
        # rk4
        k1 = f(h)
        k2 = f(h + (0.5 * dt) * k1)
        k3 = f(h + (0.5 * dt) * k2)
        k4 = f(h + dt * k3)
        return h + (dt / 6.0) * (k1 + 2.0 * k2 + 2.0 * k3 + k4)

    h0 = h0_ref[...].astype(jnp.float32)
    h_final = lax.fori_loop(0, n_steps, step, h0, unroll=True)
    out_ref[...] = h_final.astype(out_ref.dtype)


# --------------------------- tiling helpers ----------------------------------


def _round_up(x, m):
    return ((x + m - 1) // m) * m


def _choose_batch_tile(B, H, itemsize=4, *, single_tile_max=256,
                       tile_budget_bytes=4 << 20, tb_cap=8192):
    """Lane-dense batch tile width for the (H, B) activation slab."""
    if B <= single_tile_max:
        return B  # one full-extent block (legal for any B; tiny batches)
    # Grow the tile to amortize the ~0.35us per-grid-step overhead.
    tb = max(_LANE, (tile_budget_bytes // (H * itemsize)) // _LANE * _LANE)
    tb = min(tb, tb_cap)
    # v7x megacore: keep at least 2 "parallel" grid points when batch allows.
    half = _round_up(-(-B // 2), _LANE)
    return max(_LANE, min(tb, half))


def _vmem_limit_bytes(H, tb, itemsize=4):
    """Resident weights + biases + double-buffered (H, tb) in/out tiles."""
    weights = 3 * H * H * itemsize + 3 * H * itemsize
    acts = 2 * 2 * H * tb * itemsize
    needed = weights + acts
    # Generous headroom, capped at v7x's 64 MiB physical VMEM.
    return int(min(max(2 * needed, 32 << 20), 64 << 20))


# ----------------------------- wrappers -------------------------------------


def ode_func_forward(params, t, h):
    """Mirrors ODEFunc.forward(t, h); t is accepted but unused (as in PyTorch)."""
    del t  # ODEFunc ignores the time argument.
    B, H = h.shape
    itemsize = h.dtype.itemsize
    tb = _choose_batch_tile(B, H, itemsize)
    x = h.T  # (H, B): wrapper-side transpose is pure layout plumbing

    const = lambda i: (0, 0)  # weights/biases stay VMEM-resident across the grid
    out = pl.pallas_call(
        _ode_func_kernel,
        out_shape=jax.ShapeDtypeStruct((H, B), h.dtype),
        grid_spec=pltpu.PrefetchScalarGridSpec(
            num_scalar_prefetch=0,
            grid=(pl.cdiv(B, tb),),
            in_specs=[
                pl.BlockSpec((H, tb), lambda i: (0, i)),   # activation tile
                pl.BlockSpec((H, H), const),               # w1
                pl.BlockSpec((H, 1), const),               # b1
                pl.BlockSpec((H, H), const),               # w2
                pl.BlockSpec((H, 1), const),               # b2
                pl.BlockSpec((H, H), const),               # w3
                pl.BlockSpec((H, 1), const),               # b3
            ],
            out_specs=pl.BlockSpec((H, tb), lambda i: (0, i)),
        ),
        compiler_params=pltpu.CompilerParams(
            dimension_semantics=("parallel",),
            vmem_limit_bytes=_vmem_limit_bytes(H, tb, itemsize)),
    )(x, params["w1"], params["b1"], params["w2"], params["b2"],
      params["w3"], params["b3"])
    return out.T


def ode_func_integrate(params, h0, t0, t1, *, n_steps=8, solver="rk4"):
    """Fixed-step odeint(ODEFunc, h0, [t0, t1]); all steps fused into one kernel."""
    if solver not in ("euler", "rk4"):
        raise NotImplementedError(f"solver '{solver}' not supported")
    B, H = h0.shape
    itemsize = h0.dtype.itemsize
    # NOTE: t0/t1 must be concrete (Python/NumPy) scalars; dt is baked into the
    # kernel as a compile-time constant.
    dt = float(t1 - t0) / float(n_steps)
    tb = _choose_batch_tile(B, H, itemsize)
    x0 = h0.T

    kernel = functools.partial(_ode_integrate_kernel,
                               dt=dt, n_steps=int(n_steps), solver=solver)
    const = lambda i: (0, 0)
    out = pl.pallas_call(
        kernel,
        out_shape=jax.ShapeDtypeStruct((H, B), h0.dtype),
        grid_spec=pltpu.PrefetchScalarGridSpec(
            num_scalar_prefetch=0,
            grid=(pl.cdiv(B, tb),),
            in_specs=[
                pl.BlockSpec((H, tb), lambda i: (0, i)),   # h0 tile
                pl.BlockSpec((H, H), const),               # w1
                pl.BlockSpec((H, 1), const),               # b1
                pl.BlockSpec((H, H), const),               # w2
                pl.BlockSpec((H, 1), const),               # b2
                pl.BlockSpec((H, H), const),               # w3
                pl.BlockSpec((H, 1), const),               # b3
            ],
            out_specs=pl.BlockSpec((H, tb), lambda i: (0, i)),
        ),
        compiler_params=pltpu.CompilerParams(
            dimension_semantics=("parallel",),
            vmem_limit_bytes=_vmem_limit_bytes(H, tb, itemsize)),
    )(x0, params["w1"], params["b1"], params["w2"], params["b2"],
      params["w3"], params["b3"])
    return out.T


# ------------------------ parameter initialization ---------------------------


def init_ode_func_params(key, hidden_size, dtype=jnp.float32):
    """PyTorch nn.Linear default init; weights kept in PyTorch (out, in) layout,
    biases stored as (H, 1) columns (lane-broadcast inside the kernel)."""
    H = hidden_size
    k = 1.0 / math.sqrt(H)
    keys = jax.random.split(key, 6)
    return dict(
        w1=jax.random.uniform(keys[0], (H, H), dtype, -k, k),
        b1=jax.random.uniform(keys[1], (H, 1), dtype, -k, k),
        w2=jax.random.uniform(keys[2], (H, H), dtype, -k, k),
        b2=jax.random.uniform(keys[3], (H, 1), dtype, -k, k),
        w3=jax.random.uniform(keys[4], (H, H), dtype, -k, k),
        b3=jax.random.uniform(keys[5], (H, 1), dtype, -k, k),
    )


# --------------------------------- main --------------------------------------

if __name__ == "__main__":
    hidden_size = 32
    batch = 2

    key = jax.random.PRNGKey(0)
    kp, kh, kb = jax.random.split(key, 3)

    params = init_ode_func_params(kp, hidden_size)
    h = jax.random.normal(kh, (batch, hidden_size), jnp.float32)
    t = jnp.float32(0.0)

    # Pure-JAX reference for ODEFunc.forward (PyTorch semantics: x @ W^T + b).
    def ref_f(x):
        z = jnp.tanh(x @ params["w1"].T + params["b1"][:, 0])
        z = jnp.tanh(z @ params["w2"].T + params["b2"][:, 0])
        return z @ params["w3"].T + params["b3"][:, 0]

    # --- forward (the spec module) ---
    out = ode_func_forward(params, t, h)
    jax.block_until_ready(out)
    assert out.shape == h.shape
    assert jnp.allclose(out, ref_f(h), atol=1e-4, rtol=1e-4), "ODEFunc kernel mismatch"

    # --- larger, ragged batch exercises the tiled 'parallel' grid (no pad/slice) ---
    h_big = jax.random.normal(kb, (1029, hidden_size), jnp.float32)
    out_big = ode_func_forward(params, t, h_big)
    jax.block_until_ready(out_big)
    assert out_big.shape == h_big.shape
    assert jnp.allclose(out_big, ref_f(h_big), atol=1e-4, rtol=1e-4), "batched mismatch"

    # --- bonus: fused fixed-step integrator (odeint over [0, 0.1]) ---
    n_steps = 8
    t1 = 0.1
    h_euler = ode_func_integrate(params, h, 0.0, t1, n_steps=n_steps, solver="euler")
    h_rk4 = ode_func_integrate(params, h, 0.0, t1, n_steps=n_steps, solver="rk4")
    jax.block_until_ready((h_euler, h_rk4))

    dt = t1 / n_steps
    h_e_ref, h_r_ref = h, h
    for _ in range(n_steps):
        h_e_ref = h_e_ref + dt * ref_f(h_e_ref)
        k1 = ref_f(h_r_ref)
        k2 = ref_f(h_r_ref + 0.5 * dt * k1)
        k3 = ref_f(h_r_ref + 0.5 * dt * k2)
        k4 = ref_f(h_r_ref + dt * k3)
        h_r_ref = h_r_ref + (dt / 6.0) * (k1 + 2.0 * k2 + 2.0 * k3 + k4)
    assert jnp.allclose(h_euler, h_e_ref, atol=1e-4, rtol=1e-4), "euler mismatch"
    assert jnp.allclose(h_rk4, h_r_ref, atol=1e-4, rtol=1e-4), "rk4 mismatch"

    print("KERNEL_OK")
</pallas_src>

<mosaic_0001>
module attributes {stable_mosaic.version = 11 : i64} {
  func.func @_ode_func_kernel(%arg0: i32, %arg1: memref<32x2xf32, #tpu.memory_space<vmem>>, %arg2: memref<32x32xf32, #tpu.memory_space<vmem>>, %arg3: memref<32x1xf32, #tpu.memory_space<vmem>>, %arg4: memref<32x32xf32, #tpu.memory_space<vmem>>, %arg5: memref<32x1xf32, #tpu.memory_space<vmem>>, %arg6: memref<32x32xf32, #tpu.memory_space<vmem>>, %arg7: memref<32x1xf32, #tpu.memory_space<vmem>>, %arg8: memref<32x2xf32, #tpu.memory_space<vmem>>) attributes {dimension_semantics = [#tpu.dimension_semantics<parallel>], iteration_bounds = array<i64: 1>, scalar_prefetch = 0 : i64, scratch_operands = 0 : i64, tpu.core_type = #tpu.core_type<tc>, window_params = [{transform_indices = @transform_0, window_bounds = array<i64: 32, 2>}, {pipeline_mode = #tpu.pipeline_mode<synchronous>, transform_indices = @transform_1, window_bounds = array<i64: 32, 32>}, {pipeline_mode = #tpu.pipeline_mode<synchronous>, transform_indices = @transform_2, window_bounds = array<i64: 32, 1>}, {pipeline_mode = #tpu.pipeline_mode<synchronous>, transform_indices = @transform_3, window_bounds = array<i64: 32, 32>}, {pipeline_mode = #tpu.pipeline_mode<synchronous>, transform_indices = @transform_4, window_bounds = array<i64: 32, 1>}, {pipeline_mode = #tpu.pipeline_mode<synchronous>, transform_indices = @transform_5, window_bounds = array<i64: 32, 32>}, {pipeline_mode = #tpu.pipeline_mode<synchronous>, transform_indices = @transform_6, window_bounds = array<i64: 32, 1>}, {transform_indices = @transform_7, window_bounds = array<i64: 32, 2>}]} {
    %c0 = arith.constant 0 : index
    %c0_0 = arith.constant 0 : index
    %0 = vector.load %arg1[%c0, %c0_0] : memref<32x2xf32, #tpu.memory_space<vmem>>, vector<32x2xf32>
    %c0_1 = arith.constant 0 : index
    %c0_2 = arith.constant 0 : index
    %1 = vector.load %arg2[%c0_1, %c0_2] : memref<32x32xf32, #tpu.memory_space<vmem>>, vector<32x32xf32>
    %cst = arith.constant dense<0.000000e+00> : vector<32x2xf32>
    %2 = tpu.matmul %1, %0, %cst {dimension_numbers = #tpu.dot_dimension_numbers<[1], [0], [0], [1], [0, 0, 1, 1], [], []>} : vector<32x32xf32>, vector<32x2xf32>, vector<32x2xf32> -> vector<32x2xf32>
    %c0_3 = arith.constant 0 : index
    %c0_4 = arith.constant 0 : index
    %3 = vector.load %arg3[%c0_3, %c0_4] : memref<32x1xf32, #tpu.memory_space<vmem>>, vector<32x1xf32>
    %4 = vector.broadcast %3 : vector<32x1xf32> to vector<32x2xf32>
    %5 = arith.addf %2, %4 : vector<32x2xf32>
    %6 = math.tanh %5 : vector<32x2xf32>
    %c0_5 = arith.constant 0 : index
    %c0_6 = arith.constant 0 : index
    %7 = vector.load %arg4[%c0_5, %c0_6] : memref<32x32xf32, #tpu.memory_space<vmem>>, vector<32x32xf32>
    %cst_7 = arith.constant dense<0.000000e+00> : vector<32x2xf32>
    %8 = tpu.matmul %7, %6, %cst_7 {dimension_numbers = #tpu.dot_dimension_numbers<[1], [0], [0], [1], [0, 0, 1, 1], [], []>} : vector<32x32xf32>, vector<32x2xf32>, vector<32x2xf32> -> vector<32x2xf32>
    %c0_8 = arith.constant 0 : index
    %c0_9 = arith.constant 0 : index
    %9 = vector.load %arg5[%c0_8, %c0_9] : memref<32x1xf32, #tpu.memory_space<vmem>>, vector<32x1xf32>
    %10 = vector.broadcast %9 : vector<32x1xf32> to vector<32x2xf32>
    %11 = arith.addf %8, %10 : vector<32x2xf32>
    %12 = math.tanh %11 : vector<32x2xf32>
    %c0_10 = arith.constant 0 : index
    %c0_11 = arith.constant 0 : index
    %13 = vector.load %arg6[%c0_10, %c0_11] : memref<32x32xf32, #tpu.memory_space<vmem>>, vector<32x32xf32>
    %cst_12 = arith.constant dense<0.000000e+00> : vector<32x2xf32>
    %14 = tpu.matmul %13, %12, %cst_12 {dimension_numbers = #tpu.dot_dimension_numbers<[1], [0], [0], [1], [0, 0, 1, 1], [], []>} : vector<32x32xf32>, vector<32x2xf32>, vector<32x2xf32> -> vector<32x2xf32>
    %c0_13 = arith.constant 0 : index
    %c0_14 = arith.constant 0 : index
    %15 = vector.load %arg7[%c0_13, %c0_14] : memref<32x1xf32, #tpu.memory_space<vmem>>, vector<32x1xf32>
    %16 = vector.broadcast %15 : vector<32x1xf32> to vector<32x2xf32>
    %17 = arith.addf %14, %16 : vector<32x2xf32>
    %c0_15 = arith.constant 0 : index
    %c0_16 = arith.constant 0 : index
    %18 = vector.load %arg8[%c0_15, %c0_16] : memref<32x2xf32, #tpu.memory_space<vmem>>, vector<32x2xf32>
    tpu.vector_store %arg8[%c0_15, %c0_16], %17 {strides = array<i32>} : memref<32x2xf32, #tpu.memory_space<vmem>>, vector<32x2xf32>,
    return
  }
  func.func @transform_0(%arg0: i32) -> (i32, i32) {
    %c0_i32 = arith.constant 0 : i32
    %c0_i32_0 = arith.constant 0 : i32
    return %c0_i32, %arg0 : i32, i32
  }
  func.func @transform_1(%arg0: i32) -> (i32, i32) {
    %c0_i32 = arith.constant 0 : i32
    %c0_i32_0 = arith.constant 0 : i32
    %c0_i32_1 = arith.constant 0 : i32
    return %c0_i32, %c0_i32_0 : i32, i32
  }
  func.func @transform_2(%arg0: i32) -> (i32, i32) {
    %c0_i32 = arith.constant 0 : i32
    %c0_i32_0 = arith.constant 0 : i32
    %c0_i32_1 = arith.constant 0 : i32
    return %c0_i32, %c0_i32_0 : i32, i32
  }
  func.func @transform_3(%arg0: i32) -> (i32, i32) {
    %c0_i32 = arith.constant 0 : i32
    %c0_i32_0 = arith.constant 0 : i32
    %c0_i32_1 = arith.constant 0 : i32
    return %c0_i32, %c0_i32_0 : i32, i32
  }
  func.func @transform_4(%arg0: i32) -> (i32, i32) {
    %c0_i32 = arith.constant 0 : i32
    %c0_i32_0 = arith.constant 0 : i32
    %c0_i32_1 = arith.constant 0 : i32
    return %c0_i32, %c0_i32_0 : i32, i32
  }
  func.func @transform_5(%arg0: i32) -> (i32, i32) {
    %c0_i32 = arith.constant 0 : i32
    %c0_i32_0 = arith.constant 0 : i32
    %c0_i32_1 = arith.constant 0 : i32
    return %c0_i32, %c0_i32_0 : i32, i32
  }
  func.func @transform_6(%arg0: i32) -> (i32, i32) {
    %c0_i32 = arith.constant 0 : i32
    %c0_i32_0 = arith.constant 0 : i32
    %c0_i32_1 = arith.constant 0 : i32
    return %c0_i32, %c0_i32_0 : i32, i32
  }
  func.func @transform_7(%arg0: i32) -> (i32, i32) {
    %c0_i32 = arith.constant 0 : i32
    %c0_i32_0 = arith.constant 0 : i32
    return %c0_i32, %arg0 : i32, i32
  }
}

</mosaic_0001>

<llo_original>
// kernel: tpu_custom_call.1
$region0: #{tpu_custom_call.1}
  #allocation0 [shape = 'u32[]', space=smem, size = 0x4, offset = 0x4, fixed_abs, tag = 'smem constant byte address 0x4 - core index']
  #allocation1 [shape = 'u32[144,128]{1,0:T(1,128)}', space=vmem, size = 0x12000, scoped, tag = 'internal scratch']
  %s0 = inlined_call_operand.vmem [shape: f32[32,2], index: 0, kind: input, shape index: {}]
  %s1 = inlined_call_operand.vmem [shape: f32[32,32], index: 1, kind: input, shape index: {}]
  %s2 = inlined_call_operand.vmem [shape: f32[32,1], index: 2, kind: input, shape index: {}]
  %s3 = inlined_call_operand.vmem [shape: f32[32,32], index: 3, kind: input, shape index: {}]
  %s4 = inlined_call_operand.vmem [shape: f32[32,1], index: 4, kind: input, shape index: {}]
  %s5 = inlined_call_operand.vmem [shape: f32[32,32], index: 5, kind: input, shape index: {}]
  %s6 = inlined_call_operand.vmem [shape: f32[32,1], index: 6, kind: input, shape index: {}]
  %s7 = inlined_call_operand.vmem [shape: f32[32,2], index: 7, kind: output, shape index: {}]
  %s8 = sld [smem:[#allocation0]]
  $region38: #{tpu_custom_call.1} parent=0
    _
  %s10 = ssub.s32 1, %s8
  %s11 = scalar_select 0, %s10, %s8
  // Predicated region
  $region2: #{tpu_custom_call.1} parent=0 // pred_check
    _
  $region3: #{tpu_custom_call.1} parent=0 // pred_check_branch
    %13 = sbr.rel (0) target = $region5
  $region4: #{tpu_custom_call.1} parent=0 // pred_region
    _
  $region5: #{tpu_custom_call.1} parent=0 // pred_fallthru
    _
  // Predicated region
  $region6: #{tpu_custom_call.1} parent=0 // pred_check
    _
  $region7: #{tpu_custom_call.1} parent=0 // pred_check_branch
    %15 = sbr.rel (0) target = $region9
  $region8: #{tpu_custom_call.1} parent=0 // pred_region
    _
  $region9: #{tpu_custom_call.1} parent=0 // pred_fallthru
    _
  // Predicated region
  $region10: #{tpu_custom_call.1} parent=0 // pred_check
    _
  $region11: #{tpu_custom_call.1} parent=0 // pred_check_branch
    %17 = sbr.rel (0) target = $region13
  $region12: #{tpu_custom_call.1} parent=0 // pred_region
    _
  $region13: #{tpu_custom_call.1} parent=0 // pred_fallthru
    _
  // Predicated region
  $region14: #{tpu_custom_call.1} parent=0 // pred_check
    _
  $region15: #{tpu_custom_call.1} parent=0 // pred_check_branch
    %19 = sbr.rel (0) target = $region17
  $region16: #{tpu_custom_call.1} parent=0 // pred_region
    _
  $region17: #{tpu_custom_call.1} parent=0 // pred_fallthru
    _
  // Predicated region
  $region18: #{tpu_custom_call.1} parent=0 // pred_check
    _
  $region19: #{tpu_custom_call.1} parent=0 // pred_check_branch
    %21 = sbr.rel (0) target = $region21
  $region20: #{tpu_custom_call.1} parent=0 // pred_region
    _
  $region21: #{tpu_custom_call.1} parent=0 // pred_fallthru
    _
  // Predicated region
  $region22: #{tpu_custom_call.1} parent=0 // pred_check
    _
  $region23: #{tpu_custom_call.1} parent=0 // pred_check_branch
    %23 = sbr.rel (0) target = $region25
  $region24: #{tpu_custom_call.1} parent=0 // pred_region
    _
  $region25: #{tpu_custom_call.1} parent=0 // pred_fallthru
    _
  // Predicated region
  $region26: #{tpu_custom_call.1} parent=0 // pred_check
    _
  $region27: #{tpu_custom_call.1} parent=0 // pred_check_branch
    %25 = sbr.rel (0) target = $region29
  $region28: #{tpu_custom_call.1} parent=0 // pred_region
    _
  $region29: #{tpu_custom_call.1} parent=0 // pred_fallthru
    _
  %v26 = vld [vmem:[%s0] sm:$0xff]
  %v27 = vld [vmem:[%s0 + $0x8] sm:$0xff]
  %v28 = vld [vmem:[%s0 + $0x10] sm:$0xff]
  %v29 = vld [vmem:[%s0 + $0x18] sm:$0xff]
  %v30 = vld [vmem:[%s1] sm:$0xff]
  %v31 = vld [vmem:[%s1 + $0x8] sm:$0xff]
  %v32 = vld [vmem:[%s1 + $0x10] sm:$0xff]
  %v33 = vld [vmem:[%s1 + $0x18] sm:$0xff]
  %v34 = vld [vmem:[%s2] sm:$0xff]
  %v35 = vld [vmem:[%s2 + $0x8] sm:$0xff]
  %v36 = vld [vmem:[%s2 + $0x10] sm:$0xff]
  %v37 = vld [vmem:[%s2 + $0x18] sm:$0xff]
  %39 = vset.pattern.permute.xlu0 0
  %40 = vperm.xlu0 %39, %v34
  %v41 = vpop.permute.xlu0 %40
  %44 = vset.pattern.permute.xlu0 0
  %45 = vperm.xlu0 %44, %v35
  %v46 = vpop.permute.xlu0 %45
  %49 = vset.pattern.permute.xlu0 0
  %50 = vperm.xlu0 %49, %v36
  %v51 = vpop.permute.xlu0 %50
  %54 = vset.pattern.permute.xlu0 0
  %55 = vperm.xlu0 %54, %v37
  %v56 = vpop.permute.xlu0 %55
  %vm58 = vcmask 261120
  %v60 = vsel %vm58, %v30, 0
  %v63 = vsel %vm58, %v31, 0
  %v66 = vsel %vm58, %v32, 0
  %v69 = vsel %vm58, %v33, 0
  %71 = vmatprep.subr.mxu0 0.0
  %72 = vmatpush1.msra.mxu0 %v26
  %73 = vmatprep.subr.mxu0 0.0
  %74 = vmatpush1.msra.mxu0 %v27
  %75 = vmatprep.subr.mxu0 0.0
  %76 = vmatpush1.msra.mxu0 %v28
  %77 = vmatprep.subr.mxu0 0.0
  %78 = vmatpush1.msra.mxu0 %v29
  %79 = vmatprep.subr.mxu0 0.0
  %80 = vmatpush1.msra.mxu0 0.0
  %81 = vmatprep.subr.mxu0 0.0
  %82 = vmatpush1.msra.mxu0 0.0
  %83 = vmatprep.subr.mxu0 0.0
  %84 = vmatpush1.msra.mxu0 0.0
  %85 = vmatprep.subr.mxu0 0.0
  %86 = vmatpush1.msra.mxu0 0.0
  %87 = vmatprep.subr.mxu0 0.0
  %88 = vmatpush1.msra.mxu0 0.0
  %89 = vmatprep.subr.mxu0 0.0
  %90 = vmatpush1.msra.mxu0 0.0
  %91 = vmatprep.subr.mxu0 0.0
  %92 = vmatpush1.msra.mxu0 0.0
  %93 = vmatprep.subr.mxu0 0.0
  %94 = vmatpush1.msra.mxu0 0.0
  %95 = vmatprep.subr.mxu0 0.0
  %96 = vmatpush1.msra.mxu0 0.0
  %97 = vmatprep.subr.mxu0 0.0
  %98 = vmatpush1.msra.mxu0 0.0
  %99 = vmatprep.subr.mxu0 0.0
  %100 = vmatpush1.msra.mxu0 0.0
  %101 = vmatprep.subr.mxu0 0.0
  %102 = vmatpush1.msra.mxu0 0.0
  %103 = vmatprep.subr.mxu0 0.0
  %104 = vmatpush1.msra.mxu0 0.0
  %105 = vmatprep.subr.mxu0 0.0
  %106 = vmatpush1.msra.mxu0 0.0
  %107 = vmatprep.subr.mxu0 0.0
  %108 = vmatpush1.msra.mxu0 0.0
  %109 = vmatprep.subr.mxu0 0.0
  %110 = vmatpush1.msra.mxu0 0.0
  %111 = vmatprep.subr.mxu0 0.0
  %112 = vmatpush1.msra.mxu0 0.0
  %113 = vmatprep.subr.mxu0 0.0
  %114 = vmatpush1.msra.mxu0 0.0
  %115 = vmatprep.subr.mxu0 0.0
  %116 = vmatpush1.msra.mxu0 0.0
  %117 = vmatprep.subr.mxu0 0.0
  %118 = vmatpush1.msra.mxu0 0.0
  %119 = vmatprep.subr.mxu0 0.0
  %120 = vmatpush1.msra.mxu0 0.0
  %121 = vmatprep.subr.mxu0 0.0
  %122 = vmatpush1.msra.mxu0 0.0
  %123 = vmatprep.subr.mxu0 0.0
  %124 = vmatpush1.msra.mxu0 0.0
  %125 = vmatprep.subr.mxu0 0.0
  %126 = vmatpush1.msra.mxu0 0.0
  %127 = vmatprep.subr.mxu0 0.0
  %128 = vmatpush1.msra.mxu0 0.0
  %129 = vmatprep.subr.mxu0 0.0
  %130 = vmatpush1.msra.mxu0 0.0
  %131 = vmatprep.subr.mxu0 0.0
  %132 = vmatpush1.msra.mxu0 0.0
  %133 = vmatprep.subr.mxu0 0.0
  %134 = vmatpush1.msra.mxu0 0.0
  %135 = vmatprep.mubr.f32.mxu0 0.0
  %136 = vmatmul.mubr.f32.gmra.mrb[0].mxu0 %v60
  %v137 = vpop.f32.mrb[0].mxu0
  %v138 = vadd.f32 %v41, %v137
  %v139 = vpop.f32.mrb[0].mxu0
  %140 = vmatprep.mubr.f32.mxu0 0.0
  %141 = vmatmul.mubr.f32.gmra.mrb[0].mxu0 %v63
  %v142 = vpop.f32.mrb[0].mxu0
  %v143 = vadd.f32 %v46, %v142
  %v144 = vpop.f32.mrb[0].mxu0
  %145 = vmatprep.mubr.f32.mxu0 0.0
  %146 = vmatmul.mubr.f32.gmra.mrb[0].mxu0 %v66
  %v147 = vpop.f32.mrb[0].mxu0
  %v148 = vadd.f32 %v51, %v147
  %v149 = vpop.f32.mrb[0].mxu0
  %150 = vmatprep.mubr.f32.mxu0 0.0
  %151 = vmatmul.mubr.f32.gmra.mrb[0].mxu0 %v69
  %v152 = vpop.f32.mrb[0].mxu0
  %v153 = vadd.f32 %v56, %v152
  %v154 = vpop.f32.mrb[0].mxu0
  %155 = vdwg.mxu0
  %v156 = vtanh.pop %v138
  %v157 = vtanh.pop %v143
  %v158 = vtanh.pop %v148
  %v159 = vtanh.pop %v153
  %v160 = vld [vmem:[%s3] sm:$0xff]
  %v161 = vld [vmem:[%s3 + $0x8] sm:$0xff]
  %v162 = vld [vmem:[%s3 + $0x10] sm:$0xff]
  %v163 = vld [vmem:[%s3 + $0x18] sm:$0xff]
  %v164 = vld [vmem:[%s4] sm:$0xff]
  %v165 = vld [vmem:[%s4 + $0x8] sm:$0xff]
  %v166 = vld [vmem:[%s4 + $0x10] sm:$0xff]
  %v167 = vld [vmem:[%s4 + $0x18] sm:$0xff]
  %169 = vset.pattern.permute.xlu0 0
  %170 = vperm.xlu0 %169, %v164
  %v171 = vpop.permute.xlu0 %170
  %174 = vset.pattern.permute.xlu0 0
  %175 = vperm.xlu0 %174, %v165
  %v176 = vpop.permute.xlu0 %175
  %179 = vset.pattern.permute.xlu0 0
  %180 = vperm.xlu0 %179, %v166
  %v181 = vpop.permute.xlu0 %180
  %184 = vset.pattern.permute.xlu0 0
  %185 = vperm.xlu0 %184, %v167
  %v186 = vpop.permute.xlu0 %185
  %v189 = vsel %vm58, %v160, 0
  %v192 = vsel %vm58, %v161, 0
  %v195 = vsel %vm58, %v162, 0
  %v198 = vsel %vm58, %v163, 0
  %200 = vmatprep.subr.mxu0 0.0
  %201 = vmatpush1.msra.mxu0 %v156
  %202 = vmatprep.subr.mxu0 0.0
  %203 = vmatpush1.msra.mxu0 %v157
  %204 = vmatprep.subr.mxu0 0.0
  %205 = vmatpush1.msra.mxu0 %v158
  %206 = vmatprep.subr.mxu0 0.0
  %207 = vmatpush1.msra.mxu0 %v159
  %208 = vmatprep.subr.mxu0 0.0
  %209 = vmatpush1.msra.mxu0 0.0
  %210 = vmatprep.subr.mxu0 0.0
  %211 = vmatpush1.msra.mxu0 0.0
  %212 = vmatprep.subr.mxu0 0.0
  %213 = vmatpush1.msra.mxu0 0.0
  %214 = vmatprep.subr.mxu0 0.0
  %215 = vmatpush1.msra.mxu0 0.0
  %216 = vmatprep.subr.mxu0 0.0
  %217 = vmatpush1.msra.mxu0 0.0
  %218 = vmatprep.subr.mxu0 0.0
  %219 = vmatpush1.msra.mxu0 0.0
  %220 = vmatprep.subr.mxu0 0.0
  %221 = vmatpush1.msra.mxu0 0.0
  %222 = vmatprep.subr.mxu0 0.0
  %223 = vmatpush1.msra.mxu0 0.0
  %224 = vmatprep.subr.mxu0 0.0
  %225 = vmatpush1.msra.mxu0 0.0
  %226 = vmatprep.subr.mxu0 0.0
  %227 = vmatpush1.msra.mxu0 0.0
  %228 = vmatprep.subr.mxu0 0.0
  %229 = vmatpush1.msra.mxu0 0.0
  %230 = vmatprep.subr.mxu0 0.0
  %231 = vmatpush1.msra.mxu0 0.0
  %232 = vmatprep.subr.mxu0 0.0
  %233 = vmatpush1.msra.mxu0 0.0
  %234 = vmatprep.subr.mxu0 0.0
  %235 = vmatpush1.msra.mxu0 0.0
  %236 = vmatprep.subr.mxu0 0.0
  %237 = vmatpush1.msra.mxu0 0.0
  %238 = vmatprep.subr.mxu0 0.0
  %239 = vmatpush1.msra.mxu0 0.0
  %240 = vmatprep.subr.mxu0 0.0
  %241 = vmatpush1.msra.mxu0 0.0
  %242 = vmatprep.subr.mxu0 0.0
  %243 = vmatpush1.msra.mxu0 0.0
  %244 = vmatprep.subr.mxu0 0.0
  %245 = vmatpush1.msra.mxu0 0.0
  %246 = vmatprep.subr.mxu0 0.0
  %247 = vmatpush1.msra.mxu0 0.0
  %248 = vmatprep.subr.mxu0 0.0
  %249 = vmatpush1.msra.mxu0 0.0
  %250 = vmatprep.subr.mxu0 0.0
  %251 = vmatpush1.msra.mxu0 0.0
  %252 = vmatprep.subr.mxu0 0.0
  %253 = vmatpush1.msra.mxu0 0.0
  %254 = vmatprep.subr.mxu0 0.0
  %255 = vmatpush1.msra.mxu0 0.0
  %256 = vmatprep.subr.mxu0 0.0
  %257 = vmatpush1.msra.mxu0 0.0
  %258 = vmatprep.subr.mxu0 0.0
  %259 = vmatpush1.msra.mxu0 0.0
  %260 = vmatprep.subr.mxu0 0.0
  %261 = vmatpush1.msra.mxu0 0.0
  %262 = vmatprep.subr.mxu0 0.0
  %263 = vmatpush1.msra.mxu0 0.0
  %264 = vmatprep.mubr.f32.mxu0 0.0
  %265 = vmatmul.mubr.f32.gmra.mrb[0].mxu0 %v189
  %v266 = vpop.f32.mrb[0].mxu0
  %v267 = vadd.f32 %v171, %v266
  %v268 = vpop.f32.mrb[0].mxu0
  %269 = vmatprep.mubr.f32.mxu0 0.0
  %270 = vmatmul.mubr.f32.gmra.mrb[0].mxu0 %v192
  %v271 = vpop.f32.mrb[0].mxu0
  %v272 = vadd.f32 %v176, %v271
  %v273 = vpop.f32.mrb[0].mxu0
  %274 = vmatprep.mubr.f32.mxu0 0.0
  %275 = vmatmul.mubr.f32.gmra.mrb[0].mxu0 %v195
  %v276 = vpop.f32.mrb[0].mxu0
  %v277 = vadd.f32 %v181, %v276
  %v278 = vpop.f32.mrb[0].mxu0
  %279 = vmatprep.mubr.f32.mxu0 0.0
  %280 = vmatmul.mubr.f32.gmra.mrb[0].mxu0 %v198
  %v281 = vpop.f32.mrb[0].mxu0
  %v282 = vadd.f32 %v186, %v281
  %v283 = vpop.f32.mrb[0].mxu0
  %284 = vdwg.mxu0
  %v285 = vtanh.pop %v267
  %v286 = vtanh.pop %v272
  %v287 = vtanh.pop %v277
  %v288 = vtanh.pop %v282
  %v289 = vld [vmem:[%s5] sm:$0xff]
  %v290 = vld [vmem:[%s5 + $0x8] sm:$0xff]
  %v291 = vld [vmem:[%s5 + $0x10] sm:$0xff]
  %v292 = vld [vmem:[%s5 + $0x18] sm:$0xff]
  %v293 = vld [vmem:[%s6] sm:$0xff]
  %v294 = vld [vmem:[%s6 + $0x8] sm:$0xff]
  %v295 = vld [vmem:[%s6 + $0x10] sm:$0xff]
  %v296 = vld [vmem:[%s6 + $0x18] sm:$0xff]
  %298 = vset.pattern.permute.xlu0 0
  %299 = vperm.xlu0 %298, %v293
  %v300 = vpop.permute.xlu0 %299
  %303 = vset.pattern.permute.xlu0 0
  %304 = vperm.xlu0 %303, %v294
  %v305 = vpop.permute.xlu0 %304
  %308 = vset.pattern.permute.xlu0 0
  %309 = vperm.xlu0 %308, %v295
  %v310 = vpop.permute.xlu0 %309
  %313 = vset.pattern.permute.xlu0 0
  %314 = vperm.xlu0 %313, %v296
  %v315 = vpop.permute.xlu0 %314
  %v318 = vsel %vm58, %v289, 0
  %v321 = vsel %vm58, %v290, 0
  %v324 = vsel %vm58, %v291, 0
  %v327 = vsel %vm58, %v292, 0
  %329 = vmatprep.subr.mxu0 0.0
  %330 = vmatpush1.msra.mxu0 %v285
  %331 = vmatprep.subr.mxu0 0.0
  %332 = vmatpush1.msra.mxu0 %v286
  %333 = vmatprep.subr.mxu0 0.0
  %334 = vmatpush1.msra.mxu0 %v287
  %335 = vmatprep.subr.mxu0 0.0
  %336 = vmatpush1.msra.mxu0 %v288
  %337 = vmatprep.subr.mxu0 0.0
  %338 = vmatpush1.msra.mxu0 0.0
  %339 = vmatprep.subr.mxu0 0.0
  %340 = vmatpush1.msra.mxu0 0.0
  %341 = vmatprep.subr.mxu0 0.0
  %342 = vmatpush1.msra.mxu0 0.0
  %343 = vmatprep.subr.mxu0 0.0
  %344 = vmatpush1.msra.mxu0 0.0
  %345 = vmatprep.subr.mxu0 0.0
  %346 = vmatpush1.msra.mxu0 0.0
  %347 = vmatprep.subr.mxu0 0.0
  %348 = vmatpush1.msra.mxu0 0.0
  %349 = vmatprep.subr.mxu0 0.0
  %350 = vmatpush1.msra.mxu0 0.0
  %351 = vmatprep.subr.mxu0 0.0
  %352 = vmatpush1.msra.mxu0 0.0
  %353 = vmatprep.subr.mxu0 0.0
  %354 = vmatpush1.msra.mxu0 0.0
  %355 = vmatprep.subr.mxu0 0.0
  %356 = vmatpush1.msra.mxu0 0.0
  %357 = vmatprep.subr.mxu0 0.0
  %358 = vmatpush1.msra.mxu0 0.0
  %359 = vmatprep.subr.mxu0 0.0
  %360 = vmatpush1.msra.mxu0 0.0
  %361 = vmatprep.subr.mxu0 0.0
  %362 = vmatpush1.msra.mxu0 0.0
  %363 = vmatprep.subr.mxu0 0.0
  %364 = vmatpush1.msra.mxu0 0.0
  %365 = vmatprep.subr.mxu0 0.0
  %366 = vmatpush1.msra.mxu0 0.0
  %367 = vmatprep.subr.mxu0 0.0
  %368 = vmatpush1.msra.mxu0 0.0
  %369 = vmatprep.subr.mxu0 0.0
  %370 = vmatpush1.msra.mxu0 0.0
  %371 = vmatprep.subr.mxu0 0.0
  %372 = vmatpush1.msra.mxu0 0.0
  %373 = vmatprep.subr.mxu0 0.0
  %374 = vmatpush1.msra.mxu0 0.0
  %375 = vmatprep.subr.mxu0 0.0
  %376 = vmatpush1.msra.mxu0 0.0
  %377 = vmatprep.subr.mxu0 0.0
  %378 = vmatpush1.msra.mxu0 0.0
  %379 = vmatprep.subr.mxu0 0.0
  %380 = vmatpush1.msra.mxu0 0.0
  %381 = vmatprep.subr.mxu0 0.0
  %382 = vmatpush1.msra.mxu0 0.0
  %383 = vmatprep.subr.mxu0 0.0
  %384 = vmatpush1.msra.mxu0 0.0
  %385 = vmatprep.subr.mxu0 0.0
  %386 = vmatpush1.msra.mxu0 0.0
  %387 = vmatprep.subr.mxu0 0.0
  %388 = vmatpush1.msra.mxu0 0.0
  %389 = vmatprep.subr.mxu0 0.0
  %390 = vmatpush1.msra.mxu0 0.0
  %391 = vmatprep.subr.mxu0 0.0
  %392 = vmatpush1.msra.mxu0 0.0
  %393 = vmatprep.mubr.f32.mxu0 0.0
  %394 = vmatmul.mubr.f32.gmra.mrb[0].mxu0 %v318
  %v395 = vpop.f32.mrb[0].mxu0
  %v396 = vadd.f32 %v300, %v395
  %v397 = vpop.f32.mrb[0].mxu0
  %398 = vmatprep.mubr.f32.mxu0 0.0
  %399 = vmatmul.mubr.f32.gmra.mrb[0].mxu0 %v321
  %v400 = vpop.f32.mrb[0].mxu0
  %v401 = vadd.f32 %v305, %v400
  %v402 = vpop.f32.mrb[0].mxu0
  %403 = vmatprep.mubr.f32.mxu0 0.0
  %404 = vmatmul.mubr.f32.gmra.mrb[0].mxu0 %v324
  %v405 = vpop.f32.mrb[0].mxu0
  %v406 = vadd.f32 %v310, %v405
  %v407 = vpop.f32.mrb[0].mxu0
  %408 = vmatprep.mubr.f32.mxu0 0.0
  %409 = vmatmul.mubr.f32.gmra.mrb[0].mxu0 %v327
  %v410 = vpop.f32.mrb[0].mxu0
  %v411 = vadd.f32 %v315, %v410
  %v412 = vpop.f32.mrb[0].mxu0
  %413 = vdwg.mxu0
  %vm414 = vcmask 15360
  %415 = vst.msk [vmem:[%s7] sm:$0xff] %vm414, %v396
  %416 = vst.msk [vmem:[%s7 + $0x8] sm:$0xff] %vm414, %v401
  %417 = vst.msk [vmem:[%s7 + $0x10] sm:$0xff] %vm414, %v406
  %418 = vst.msk [vmem:[%s7 + $0x18] sm:$0xff] %vm414, %v411
  // Predicated region
  $region30: #{tpu_custom_call.1} parent=0 // pred_check
    _
  $region31: #{tpu_custom_call.1} parent=0 // pred_check_branch
    %420 = sbr.rel (0) target = $region33
  $region32: #{tpu_custom_call.1} parent=0 // pred_region
    _
  $region33: #{tpu_custom_call.1} parent=0 // pred_fallthru
    _
  // Predicated region
  $region34: #{tpu_custom_call.1} parent=0 // pred_check
    _
  $region35: #{tpu_custom_call.1} parent=0 // pred_check_branch
    %422 = sbr.rel (0) target = $region37
  $region36: #{tpu_custom_call.1} parent=0 // pred_region
    _
  $region37: #{tpu_custom_call.1} parent=0 // pred_fallthru
    _

</llo_original>
